<compile_context>
chip_gen: v5e
topology: v5e:2x2
jax: 0.10.0
libtpu: 0.0.40
codegen_flags: <defaults>
</compile_context>

<pallas_src>
import math
from functools import partial

import jax
import jax.numpy as jnp
from jax import lax
from jax.experimental import pallas as pl
from jax.experimental.pallas import tpu as pltpu

N_BISECT_ITERS = 50          # entmax_bisect default (used by the pure-JAX reference)
N_BISECT_ITERS_KERNEL = 30   # converged for f32 (bracket < f32 eps after ~25 halvings)


def _entmax_bisect(X, alpha, n_iter=N_BISECT_ITERS, axis=-1):
    """alpha-entmax over `axis` via bisection (matches entmax.entmax_bisect)."""
    am1 = alpha - 1.0
    inv_am1 = 1.0 / am1
    d = X.shape[axis]

    Xs = X * am1
    max_val = jnp.max(Xs, axis=axis, keepdims=True)

    def p_fn(z):
        # clamp(z, min=0) ** (1 / (alpha - 1)), computed safely via exp/log
        zc = jnp.maximum(z, 0.0)
        safe = jnp.where(zc > 0, zc, 1.0)
        return jnp.where(zc > 0, jnp.exp(inv_am1 * jnp.log(safe)), 0.0)

    # _gp(x, alpha) = x ** (alpha - 1);  gp(1) == 1
    gp_invd = jnp.exp(am1 * jnp.log(1.0 / d))
    tau_lo = max_val - 1.0
    tau_hi = max_val - gp_invd
    f_lo = jnp.sum(p_fn(Xs - tau_lo), axis=axis, keepdims=True) - 1.0
    dm0 = tau_hi - tau_lo

    def body(_, carry):
        dm, t_lo, _p = carry
        dm = dm * 0.5
        tau_m = t_lo + dm
        p_m = p_fn(Xs - tau_m)
        f_m = jnp.sum(p_m, axis=axis, keepdims=True) - 1.0
        t_lo = jnp.where((f_m * f_lo) >= 0, tau_m, t_lo)
        return dm, t_lo, p_m

    _, _, p_m = lax.fori_loop(0, n_iter, body, (dm0, tau_lo, jnp.zeros_like(Xs)))
    return p_m / jnp.sum(p_m, axis=axis, keepdims=True)


def _attn_kernel(alpha_ref, xw_ref, xwt_ref, wkbdT_ref, wqbd_ref, wvbd_ref,
                 gmask_ref, wu_ref, bu_ref, o_ref, *,
                 heads, emb, batch, seq_len, n_iter):
    S = emb // heads
    T = seq_len
    G = batch * heads                       # number of independent attention groups
    scale = 1.0 / (emb ** 0.25)
    alpha = alpha_ref[0, 0]

    xw = xw_ref[...]                        # (T, G*S): xw[t, g*S+s] = x[b, t, h*S+s]
    xwt = xwt_ref[...]                      # (G*S, T)

    # --- projections: all B*H groups with three full-width matmuls (block-diag W) ---
    klhs = jnp.dot(xw, wkbdT_ref[...], preferred_element_type=jnp.float32) * scale  # (T_k, G*S)
    qt = jnp.dot(wqbd_ref[...], xwt, preferred_element_type=jnp.float32) * scale    # (G*S, T_q)
    vt = jnp.dot(wvbd_ref[...], xwt, preferred_element_type=jnp.float32)            # (G*S, T_k)

    # --- stacked, lane-dense scores: scores[t_k, g*T + t_q] = <k_g[t_k], q_g[t_q]>/sqrt(E)
    q_bd = jnp.concatenate([qt] * G, axis=1) * gmask_ref[...]                        # (G*S, G*T)
    scores = jnp.dot(klhs, q_bd, preferred_element_type=jnp.float32)                 # (T_k, G*T)

    # --- one bisection over all G*T_q entmax problems (reduction over sublane axis) ---
    p = _entmax_bisect(scores, alpha, n_iter=n_iter, axis=0)                         # (T_k, G*T)

    # --- attention-weighted values per group + head-unifying linear per batch ---
    wu = wu_ref[...]                        # (E, E)   (unifyheads weight, un-transposed)
    bu = bu_ref[...]                        # (E, 1)
    for b_i in range(batch):
        outs = []
        for h in range(heads):
            g = b_i * heads + h
            vt_g = vt[g * S:(g + 1) * S, :]               # (S, T_k) — aligned sublane slice
            p_g = p[:, g * T:(g + 1) * T]                 # (T_k, T_q)
            outs.append(jnp.dot(vt_g, p_g,
                                preferred_element_type=jnp.float32))   # (S, T_q)
        out_bT = jnp.concatenate(outs, axis=0)            # (E, T_q), rows = (h, s)
        # y_b^T = Wu @ out_b^T + bias ; written transposed, wrapper flips it back.
        o_ref[b_i] = jnp.dot(wu, out_bT, preferred_element_type=jnp.float32) + bu


def self_attention_narrow(x, params, heads, n_iter=N_BISECT_ITERS_KERNEL):
    """Pallas forward of SelfAttentionNarrow (mask=False)."""
    b, t, e = x.shape
    assert e % heads == 0
    s = e // heads
    grp = b * heads                                        # B*H attention groups

    # entmax bisection is only defined for alpha > 1 (the module learns alpha).
    alpha = jnp.maximum(params["alpha"].reshape(1, 1).astype(jnp.float32), 1.0 + 1e-4)

    # ---- host-side layout plumbing (free): group-major views of x and block-diag weights
    xw = jnp.transpose(x.astype(jnp.float32), (1, 0, 2)).reshape(t, b * e)   # (T, G*S)
    xwt = xw.T                                                               # (G*S, T)
    eye_g = jnp.eye(grp, dtype=jnp.float32)
    wq_bd = jnp.kron(eye_g, params["wq"].astype(jnp.float32))                # (G*S, G*S)
    wk_bdT = jnp.kron(eye_g, params["wk"].astype(jnp.float32)).T             # (G*S, G*S)
    wv_bd = jnp.kron(eye_g, params["wv"].astype(jnp.float32))                # (G*S, G*S)
    # group mask for the block-diagonal score matmul: (G*S, G*T), 1 where groups match
    gmask = (jnp.arange(grp * s)[:, None] // s ==
             jnp.arange(grp * t)[None, :] // t).astype(jnp.float32)
    wu = params["wu"].astype(jnp.float32)                                    # (E, H*S)
    bu_col = params["bu"].reshape(e, 1).astype(jnp.float32)                  # (E, 1)

    gs, gt = grp * s, grp * t
    flops = (3 * 2 * t * gs * gs          # block-diag projections
             + 2 * t * gs * gt            # stacked score matmul
             + grp * 2 * s * t * t        # per-group P @ V
             + b * 2 * e * e * t          # unify matmuls
             + 14 * n_iter * t * gt)      # bisection element-wise work (rough)
    transcendentals = 2 * (n_iter + 2) * t * gt
    bytes_accessed = 4 * (xw.size + xwt.size + 3 * wq_bd.size + gmask.size
                          + wu.size + e + b * t * e + 1)

    kernel = partial(_attn_kernel, heads=heads, emb=e, batch=b, seq_len=t,
                     n_iter=n_iter)

    vmem_spec = pl.BlockSpec(memory_space=pltpu.MemorySpace.VMEM)
    out_t = pl.pallas_call(
        kernel,
        out_shape=jax.ShapeDtypeStruct((b, e, t), jnp.float32),   # transposed output
        in_specs=[
            pl.BlockSpec(memory_space=pltpu.MemorySpace.SMEM),    # alpha (1,1)
            vmem_spec,   # xw      (T, G*S)
            vmem_spec,   # xwt     (G*S, T)
            vmem_spec,   # Wk block-diag^T
            vmem_spec,   # Wq block-diag
            vmem_spec,   # Wv block-diag
            vmem_spec,   # group mask (G*S, G*T)
            vmem_spec,   # Wu (E, E)
            vmem_spec,   # bias (E, 1)
        ],
        out_specs=pl.BlockSpec(memory_space=pltpu.MemorySpace.VMEM),
        cost_estimate=pl.CostEstimate(flops=int(flops),
                                      transcendentals=int(transcendentals),
                                      bytes_accessed=int(bytes_accessed)),
    )(alpha, xw, xwt, wk_bdT, wq_bd, wv_bd, gmask, wu, bu_col)

    return jnp.transpose(out_t, (0, 2, 1))                        # (B, T, E)


def reference(x, params, heads):
    """Pure-JAX reference mirroring the PyTorch forward (50-iteration entmax)."""
    b, t, e = x.shape
    s = e // heads
    alpha = params["alpha"][0]
    xr = x.reshape(b, t, heads, s)
    q = jnp.einsum("bths,os->btho", xr, params["wq"])
    k = jnp.einsum("bths,os->btho", xr, params["wk"])
    v = jnp.einsum("bths,os->btho", xr, params["wv"])
    q = jnp.transpose(q, (0, 2, 1, 3)).reshape(b * heads, t, s) / e ** 0.25
    k = jnp.transpose(k, (0, 2, 1, 3)).reshape(b * heads, t, s) / e ** 0.25
    v = jnp.transpose(v, (0, 2, 1, 3)).reshape(b * heads, t, s)
    dot = jnp.einsum("bts,bus->btu", q, k)
    p = _entmax_bisect(dot, alpha, n_iter=N_BISECT_ITERS, axis=-1)
    out = jnp.einsum("btu,bus->bts", p, v).reshape(b, heads, t, s)
    out = jnp.transpose(out, (0, 2, 1, 3)).reshape(b, t, heads * s)
    return out @ params["wu"].T + params["bu"]


if __name__ == "__main__":
    b, t, e, heads = 2, 16, 32, 4
    s = e // heads

    key = jax.random.PRNGKey(0)
    kx, kq, kk, kv, ku, kb = jax.random.split(key, 6)
    x = jax.random.normal(kx, (b, t, e), jnp.float32)

    params = {
        # nn.Parameter(torch.randn(1)); fixed deterministically to 1.5 (valid entmax alpha)
        "alpha": jnp.array([1.5], jnp.float32),
        "wq": jax.random.normal(kq, (s, s), jnp.float32) / math.sqrt(s),
        "wk": jax.random.normal(kk, (s, s), jnp.float32) / math.sqrt(s),
        "wv": jax.random.normal(kv, (s, s), jnp.float32) / math.sqrt(s),
        "wu": jax.random.normal(ku, (e, heads * s), jnp.float32) / math.sqrt(e),
        "bu": jax.random.normal(kb, (e,), jnp.float32) * 0.01,
    }

    y = self_attention_narrow(x, params, heads)
    jax.block_until_ready(y)

    y_ref = reference(x, params, heads)
    err = float(jnp.max(jnp.abs(y - y_ref)))
    assert err < 1e-2, f"kernel/reference mismatch: max abs err = {err}"

    print("KERNEL_OK")
</pallas_src>

<mosaic_0001>
module attributes {stable_mosaic.version = 11 : i64} {
  func.func @_attn_kernel(%arg0: memref<1x1xf32, #tpu.memory_space<smem>>, %arg1: memref<16x64xf32, #tpu.memory_space<vmem>>, %arg2: memref<64x16xf32, #tpu.memory_space<vmem>>, %arg3: memref<64x64xf32, #tpu.memory_space<vmem>>, %arg4: memref<64x64xf32, #tpu.memory_space<vmem>>, %arg5: memref<64x64xf32, #tpu.memory_space<vmem>>, %arg6: memref<64x128xf32, #tpu.memory_space<vmem>>, %arg7: memref<32x32xf32, #tpu.memory_space<vmem>>, %arg8: memref<32x1xf32, #tpu.memory_space<vmem>>, %arg9: memref<2x32x16xf32, #tpu.memory_space<vmem>>) attributes {dimension_semantics = [], scalar_prefetch = 0 : i64, scratch_operands = 0 : i64, tpu.core_type = #tpu.core_type<tc>} {
    %c0 = arith.constant 0 : index
    %c0_0 = arith.constant 0 : index
    %0 = memref.load %arg0[%c0, %c0_0] : memref<1x1xf32, #tpu.memory_space<smem>>
    %c0_1 = arith.constant 0 : index
    %c0_2 = arith.constant 0 : index
    %1 = vector.load %arg1[%c0_1, %c0_2] : memref<16x64xf32, #tpu.memory_space<vmem>>, vector<16x64xf32>
    %c0_3 = arith.constant 0 : index
    %c0_4 = arith.constant 0 : index
    %2 = vector.load %arg2[%c0_3, %c0_4] : memref<64x16xf32, #tpu.memory_space<vmem>>, vector<64x16xf32>
    %c0_5 = arith.constant 0 : index
    %c0_6 = arith.constant 0 : index
    %3 = vector.load %arg3[%c0_5, %c0_6] : memref<64x64xf32, #tpu.memory_space<vmem>>, vector<64x64xf32>
    %cst = arith.constant dense<0.000000e+00> : vector<16x64xf32>
    %4 = tpu.matmul %1, %3, %cst {dimension_numbers = #tpu.dot_dimension_numbers<[1], [0], [0], [1], [0, 0, 1, 1], [], []>} : vector<16x64xf32>, vector<64x64xf32>, vector<16x64xf32> -> vector<16x64xf32>
    %cst_7 = arith.constant 0.420448214 : f32
    %5 = vector.broadcast %cst_7 : f32 to vector<16x64xf32>
    %6 = arith.mulf %4, %5 : vector<16x64xf32>
    %c0_8 = arith.constant 0 : index
    %c0_9 = arith.constant 0 : index
    %7 = vector.load %arg4[%c0_8, %c0_9] : memref<64x64xf32, #tpu.memory_space<vmem>>, vector<64x64xf32>
    %cst_10 = arith.constant dense<0.000000e+00> : vector<64x16xf32>
    %8 = tpu.matmul %7, %2, %cst_10 {dimension_numbers = #tpu.dot_dimension_numbers<[1], [0], [0], [1], [0, 0, 1, 1], [], []>} : vector<64x64xf32>, vector<64x16xf32>, vector<64x16xf32> -> vector<64x16xf32>
    %cst_11 = arith.constant 0.420448214 : f32
    %9 = vector.broadcast %cst_11 : f32 to vector<64x16xf32>
    %10 = arith.mulf %8, %9 : vector<64x16xf32>
    %c0_12 = arith.constant 0 : index
    %c0_13 = arith.constant 0 : index
    %11 = vector.load %arg5[%c0_12, %c0_13] : memref<64x64xf32, #tpu.memory_space<vmem>>, vector<64x64xf32>
    %cst_14 = arith.constant dense<0.000000e+00> : vector<64x16xf32>
    %12 = tpu.matmul %11, %2, %cst_14 {dimension_numbers = #tpu.dot_dimension_numbers<[1], [0], [0], [1], [0, 0, 1, 1], [], []>} : vector<64x64xf32>, vector<64x16xf32>, vector<64x16xf32> -> vector<64x16xf32>
    %13 = tpu.concatenate %10, %10, %10, %10, %10, %10, %10, %10 in 1 : vector<64x16xf32>, vector<64x16xf32>, vector<64x16xf32>, vector<64x16xf32>, vector<64x16xf32>, vector<64x16xf32>, vector<64x16xf32>, vector<64x16xf32> -> vector<64x128xf32>
    %c0_15 = arith.constant 0 : index
    %c0_16 = arith.constant 0 : index
    %14 = vector.load %arg6[%c0_15, %c0_16] : memref<64x128xf32, #tpu.memory_space<vmem>>, vector<64x128xf32>
    %15 = arith.mulf %13, %14 : vector<64x128xf32>
    %cst_17 = arith.constant dense<0.000000e+00> : vector<16x128xf32>
    %16 = tpu.matmul %6, %15, %cst_17 {dimension_numbers = #tpu.dot_dimension_numbers<[1], [0], [0], [1], [0, 0, 1, 1], [], []>} : vector<16x64xf32>, vector<64x128xf32>, vector<16x128xf32> -> vector<16x128xf32>
    %cst_18 = arith.constant 1.000000e+00 : f32
    %17 = arith.subf %0, %cst_18 : f32
    %cst_19 = arith.constant 1.000000e+00 : f32
    %18 = arith.divf %cst_19, %17 : f32
    %19 = vector.broadcast %17 : f32 to vector<16x128xf32>
    %20 = arith.mulf %16, %19 : vector<16x128xf32>
    %cst_20 = arith.constant dense<0xFF800000> : vector<128xf32>
    %21 = vector.multi_reduction <maximumf>, %20, %cst_20 [0] : vector<16x128xf32> to vector<128xf32>
    %22 = vector.shape_cast %21 : vector<128xf32> to vector<1x128xf32>
    %cst_21 = arith.constant 6.250000e-02 : f32
    %23 = math.log %cst_21 : f32
    %24 = arith.mulf %17, %23 : f32
    %25 = math.exp %24 : f32
    %cst_22 = arith.constant 1.000000e+00 : f32
    %26 = vector.broadcast %cst_22 : f32 to vector<1x128xf32>
    %27 = arith.subf %22, %26 : vector<1x128xf32>
    %28 = vector.broadcast %25 : f32 to vector<1x128xf32>
    %29 = arith.subf %22, %28 : vector<1x128xf32>
    %30 = vector.broadcast %27 : vector<1x128xf32> to vector<16x128xf32>
    %31 = arith.subf %20, %30 : vector<16x128xf32>
    %cst_23 = arith.constant 0.000000e+00 : f32
    %32 = vector.broadcast %cst_23 : f32 to vector<16x128xf32>
    %33 = arith.maximumf %31, %32 : vector<16x128xf32>
    %cst_24 = arith.constant 0.000000e+00 : f32
    %34 = vector.broadcast %cst_24 : f32 to vector<16x128xf32>
    %35 = arith.cmpf ogt, %33, %34 : vector<16x128xf32>
    %cst_25 = arith.constant 1.000000e+00 : f32
    %36 = vector.broadcast %cst_25 : f32 to vector<16x128xf32>
    %37 = arith.select %35, %33, %36 : vector<16x128xi1>, vector<16x128xf32>
    %cst_26 = arith.constant 0.000000e+00 : f32
    %38 = vector.broadcast %cst_26 : f32 to vector<16x128xf32>
    %39 = arith.cmpf ogt, %33, %38 : vector<16x128xf32>
    %40 = math.log %37 : vector<16x128xf32>
    %41 = vector.broadcast %18 : f32 to vector<16x128xf32>
    %42 = arith.mulf %41, %40 : vector<16x128xf32>
    %43 = math.exp %42 : vector<16x128xf32>
    %cst_27 = arith.constant 0.000000e+00 : f32
    %44 = vector.broadcast %cst_27 : f32 to vector<16x128xf32>
    %45 = arith.select %39, %43, %44 : vector<16x128xi1>, vector<16x128xf32>
    %cst_28 = arith.constant dense<0.000000e+00> : vector<128xf32>
    %46 = vector.multi_reduction <add>, %45, %cst_28 [0] : vector<16x128xf32> to vector<128xf32>
    %47 = vector.shape_cast %46 : vector<128xf32> to vector<1x128xf32>
    %cst_29 = arith.constant 1.000000e+00 : f32
    %48 = vector.broadcast %cst_29 : f32 to vector<1x128xf32>
    %49 = arith.subf %47, %48 : vector<1x128xf32>
    %50 = arith.subf %29, %27 : vector<1x128xf32>
    %cst_30 = arith.constant 0.000000e+00 : f32
    %51 = vector.broadcast %cst_30 : f32 to vector<16x128xf32>
    %c0_i32 = arith.constant 0 : i32
    %c30_i32 = arith.constant 30 : i32
    %52 = arith.addi %c0_i32, %c30_i32 : i32
    %c1_i32 = arith.constant 1 : i32
    %53:3 = scf.for %arg10 = %c0_i32 to %52 step %c1_i32 iter_args(%arg11 = %50, %arg12 = %27, %arg13 = %51) -> (vector<1x128xf32>, vector<1x128xf32>, vector<16x128xf32>)  : i32 {
      %cst_51 = arith.constant 5.000000e-01 : f32
      %98 = vector.broadcast %cst_51 : f32 to vector<1x128xf32>
      %99 = arith.mulf %arg11, %98 : vector<1x128xf32>
      %100 = arith.addf %arg12, %99 : vector<1x128xf32>
      %101 = vector.broadcast %100 : vector<1x128xf32> to vector<16x128xf32>
      %102 = arith.subf %20, %101 : vector<16x128xf32>
      %cst_52 = arith.constant 0.000000e+00 : f32
      %103 = vector.broadcast %cst_52 : f32 to vector<16x128xf32>
      %104 = arith.maximumf %102, %103 : vector<16x128xf32>
      %cst_53 = arith.constant 0.000000e+00 : f32
      %105 = vector.broadcast %cst_53 : f32 to vector<16x128xf32>
      %106 = arith.cmpf ogt, %104, %105 : vector<16x128xf32>
      %cst_54 = arith.constant 1.000000e+00 : f32
      %107 = vector.broadcast %cst_54 : f32 to vector<16x128xf32>
      %108 = arith.select %106, %104, %107 : vector<16x128xi1>, vector<16x128xf32>
      %cst_55 = arith.constant 0.000000e+00 : f32
      %109 = vector.broadcast %cst_55 : f32 to vector<16x128xf32>
      %110 = arith.cmpf ogt, %104, %109 : vector<16x128xf32>
      %111 = math.log %108 : vector<16x128xf32>
      %112 = vector.broadcast %18 : f32 to vector<16x128xf32>
      %113 = arith.mulf %112, %111 : vector<16x128xf32>
      %114 = math.exp %113 : vector<16x128xf32>
      %cst_56 = arith.constant 0.000000e+00 : f32
      %115 = vector.broadcast %cst_56 : f32 to vector<16x128xf32>
      %116 = arith.select %110, %114, %115 : vector<16x128xi1>, vector<16x128xf32>
      %cst_57 = arith.constant dense<0.000000e+00> : vector<128xf32>
      %117 = vector.multi_reduction <add>, %116, %cst_57 [0] : vector<16x128xf32> to vector<128xf32>
      %118 = vector.shape_cast %117 : vector<128xf32> to vector<1x128xf32>
      %cst_58 = arith.constant 1.000000e+00 : f32
      %119 = vector.broadcast %cst_58 : f32 to vector<1x128xf32>
      %120 = arith.subf %118, %119 : vector<1x128xf32>
      %121 = arith.mulf %120, %49 : vector<1x128xf32>
      %cst_59 = arith.constant 0.000000e+00 : f32
      %122 = vector.broadcast %cst_59 : f32 to vector<1x128xf32>
      %123 = arith.cmpf oge, %121, %122 : vector<1x128xf32>
      %124 = arith.select %123, %100, %arg12 : vector<1x128xi1>, vector<1x128xf32>
      scf.yield %99, %124, %116 : vector<1x128xf32>, vector<1x128xf32>, vector<16x128xf32>
    }
    %cst_31 = arith.constant dense<0.000000e+00> : vector<128xf32>
    %54 = vector.multi_reduction <add>, %53#2, %cst_31 [0] : vector<16x128xf32> to vector<128xf32>
    %55 = vector.shape_cast %54 : vector<128xf32> to vector<1x128xf32>
    %56 = vector.broadcast %55 : vector<1x128xf32> to vector<16x128xf32>
    %57 = arith.divf %53#2, %56 : vector<16x128xf32>
    %c0_32 = arith.constant 0 : index
    %c0_33 = arith.constant 0 : index
    %58 = vector.load %arg7[%c0_32, %c0_33] : memref<32x32xf32, #tpu.memory_space<vmem>>, vector<32x32xf32>
    %c0_34 = arith.constant 0 : index
    %c0_35 = arith.constant 0 : index
    %59 = vector.load %arg8[%c0_34, %c0_35] : memref<32x1xf32, #tpu.memory_space<vmem>>, vector<32x1xf32>
    %60 = vector.extract_strided_slice %12 {offsets = [0, 0], sizes = [8, 16], strides = [1, 1]} : vector<64x16xf32> to vector<8x16xf32>
    %61 = vector.extract_strided_slice %57 {offsets = [0, 0], sizes = [16, 16], strides = [1, 1]} : vector<16x128xf32> to vector<16x16xf32>
    %cst_36 = arith.constant dense<0.000000e+00> : vector<8x16xf32>
    %62 = tpu.matmul %60, %61, %cst_36 {dimension_numbers = #tpu.dot_dimension_numbers<[1], [0], [0], [1], [0, 0, 1, 1], [], []>} : vector<8x16xf32>, vector<16x16xf32>, vector<8x16xf32> -> vector<8x16xf32>
    %63 = vector.extract_strided_slice %12 {offsets = [8, 0], sizes = [8, 16], strides = [1, 1]} : vector<64x16xf32> to vector<8x16xf32>
    %64 = vector.extract_strided_slice %57 {offsets = [0, 16], sizes = [16, 16], strides = [1, 1]} : vector<16x128xf32> to vector<16x16xf32>
    %cst_37 = arith.constant dense<0.000000e+00> : vector<8x16xf32>
    %65 = tpu.matmul %63, %64, %cst_37 {dimension_numbers = #tpu.dot_dimension_numbers<[1], [0], [0], [1], [0, 0, 1, 1], [], []>} : vector<8x16xf32>, vector<16x16xf32>, vector<8x16xf32> -> vector<8x16xf32>
    %66 = vector.extract_strided_slice %12 {offsets = [16, 0], sizes = [8, 16], strides = [1, 1]} : vector<64x16xf32> to vector<8x16xf32>
    %67 = vector.extract_strided_slice %57 {offsets = [0, 32], sizes = [16, 16], strides = [1, 1]} : vector<16x128xf32> to vector<16x16xf32>
    %cst_38 = arith.constant dense<0.000000e+00> : vector<8x16xf32>
    %68 = tpu.matmul %66, %67, %cst_38 {dimension_numbers = #tpu.dot_dimension_numbers<[1], [0], [0], [1], [0, 0, 1, 1], [], []>} : vector<8x16xf32>, vector<16x16xf32>, vector<8x16xf32> -> vector<8x16xf32>
    %69 = vector.extract_strided_slice %12 {offsets = [24, 0], sizes = [8, 16], strides = [1, 1]} : vector<64x16xf32> to vector<8x16xf32>
    %70 = vector.extract_strided_slice %57 {offsets = [0, 48], sizes = [16, 16], strides = [1, 1]} : vector<16x128xf32> to vector<16x16xf32>
    %cst_39 = arith.constant dense<0.000000e+00> : vector<8x16xf32>
    %71 = tpu.matmul %69, %70, %cst_39 {dimension_numbers = #tpu.dot_dimension_numbers<[1], [0], [0], [1], [0, 0, 1, 1], [], []>} : vector<8x16xf32>, vector<16x16xf32>, vector<8x16xf32> -> vector<8x16xf32>
    %72 = tpu.concatenate %62, %65, %68, %71 in 0 : vector<8x16xf32>, vector<8x16xf32>, vector<8x16xf32>, vector<8x16xf32> -> vector<32x16xf32>
    %cst_40 = arith.constant dense<0.000000e+00> : vector<32x16xf32>
    %73 = tpu.matmul %58, %72, %cst_40 {dimension_numbers = #tpu.dot_dimension_numbers<[1], [0], [0], [1], [0, 0, 1, 1], [], []>} : vector<32x32xf32>, vector<32x16xf32>, vector<32x16xf32> -> vector<32x16xf32>
    %74 = vector.broadcast %59 : vector<32x1xf32> to vector<32x16xf32>
    %75 = arith.addf %73, %74 : vector<32x16xf32>
    %c0_41 = arith.constant 0 : index
    %c0_42 = arith.constant 0 : index
    %c0_43 = arith.constant 0 : index
    %76 = vector.load %arg9[%c0_41, %c0_42, %c0_43] : memref<2x32x16xf32, #tpu.memory_space<vmem>>, vector<1x32x16xf32>
    %77 = vector.shape_cast %76 : vector<1x32x16xf32> to vector<32x16xf32>
    %78 = vector.shape_cast %75 : vector<32x16xf32> to vector<1x32x16xf32>
    tpu.vector_store %arg9[%c0_41, %c0_42, %c0_43], %78 {strides = array<i32>} : memref<2x32x16xf32, #tpu.memory_space<vmem>>, vector<1x32x16xf32>,
    %79 = vector.extract_strided_slice %12 {offsets = [32, 0], sizes = [8, 16], strides = [1, 1]} : vector<64x16xf32> to vector<8x16xf32>
    %80 = vector.extract_strided_slice %57 {offsets = [0, 64], sizes = [16, 16], strides = [1, 1]} : vector<16x128xf32> to vector<16x16xf32>
    %cst_44 = arith.constant dense<0.000000e+00> : vector<8x16xf32>
    %81 = tpu.matmul %79, %80, %cst_44 {dimension_numbers = #tpu.dot_dimension_numbers<[1], [0], [0], [1], [0, 0, 1, 1], [], []>} : vector<8x16xf32>, vector<16x16xf32>, vector<8x16xf32> -> vector<8x16xf32>
    %82 = vector.extract_strided_slice %12 {offsets = [40, 0], sizes = [8, 16], strides = [1, 1]} : vector<64x16xf32> to vector<8x16xf32>
    %83 = vector.extract_strided_slice %57 {offsets = [0, 80], sizes = [16, 16], strides = [1, 1]} : vector<16x128xf32> to vector<16x16xf32>
    %cst_45 = arith.constant dense<0.000000e+00> : vector<8x16xf32>
    %84 = tpu.matmul %82, %83, %cst_45 {dimension_numbers = #tpu.dot_dimension_numbers<[1], [0], [0], [1], [0, 0, 1, 1], [], []>} : vector<8x16xf32>, vector<16x16xf32>, vector<8x16xf32> -> vector<8x16xf32>
    %85 = vector.extract_strided_slice %12 {offsets = [48, 0], sizes = [8, 16], strides = [1, 1]} : vector<64x16xf32> to vector<8x16xf32>
    %86 = vector.extract_strided_slice %57 {offsets = [0, 96], sizes = [16, 16], strides = [1, 1]} : vector<16x128xf32> to vector<16x16xf32>
    %cst_46 = arith.constant dense<0.000000e+00> : vector<8x16xf32>
    %87 = tpu.matmul %85, %86, %cst_46 {dimension_numbers = #tpu.dot_dimension_numbers<[1], [0], [0], [1], [0, 0, 1, 1], [], []>} : vector<8x16xf32>, vector<16x16xf32>, vector<8x16xf32> -> vector<8x16xf32>
    %88 = vector.extract_strided_slice %12 {offsets = [56, 0], sizes = [8, 16], strides = [1, 1]} : vector<64x16xf32> to vector<8x16xf32>
    %89 = vector.extract_strided_slice %57 {offsets = [0, 112], sizes = [16, 16], strides = [1, 1]} : vector<16x128xf32> to vector<16x16xf32>
    %cst_47 = arith.constant dense<0.000000e+00> : vector<8x16xf32>
    %90 = tpu.matmul %88, %89, %cst_47 {dimension_numbers = #tpu.dot_dimension_numbers<[1], [0], [0], [1], [0, 0, 1, 1], [], []>} : vector<8x16xf32>, vector<16x16xf32>, vector<8x16xf32> -> vector<8x16xf32>
    %91 = tpu.concatenate %81, %84, %87, %90 in 0 : vector<8x16xf32>, vector<8x16xf32>, vector<8x16xf32>, vector<8x16xf32> -> vector<32x16xf32>
    %cst_48 = arith.constant dense<0.000000e+00> : vector<32x16xf32>
    %92 = tpu.matmul %58, %91, %cst_48 {dimension_numbers = #tpu.dot_dimension_numbers<[1], [0], [0], [1], [0, 0, 1, 1], [], []>} : vector<32x32xf32>, vector<32x16xf32>, vector<32x16xf32> -> vector<32x16xf32>
    %93 = vector.broadcast %59 : vector<32x1xf32> to vector<32x16xf32>
    %94 = arith.addf %92, %93 : vector<32x16xf32>
    %c1 = arith.constant 1 : index
    %c0_49 = arith.constant 0 : index
    %c0_50 = arith.constant 0 : index
    %95 = vector.load %arg9[%c1, %c0_49, %c0_50] : memref<2x32x16xf32, #tpu.memory_space<vmem>>, vector<1x32x16xf32>
    %96 = vector.shape_cast %95 : vector<1x32x16xf32> to vector<32x16xf32>
    %97 = vector.shape_cast %94 : vector<32x16xf32> to vector<1x32x16xf32>
    tpu.vector_store %arg9[%c1, %c0_49, %c0_50], %97 {strides = array<i32>} : memref<2x32x16xf32, #tpu.memory_space<vmem>>, vector<1x32x16xf32>,
    return
  }
}

</mosaic_0001>

<llo_original>
// kernel: tpu_custom_call.1
$region0: #{tpu_custom_call.1}
  #allocation0 [shape = 'u32[]', space=smem, size = 0x4, offset = 0x4, fixed_abs, tag = 'smem constant byte address 0x4 - core index']
  #allocation1 [shape = 'u32[72,128]{1,0:T(1,128)}', space=vmem, size = 0x9000, scoped, tag = 'internal scratch']
  #allocation2 [shape = 'f32[1,1]{1,0:T(1,128)S(6)}', space=smem, size = 0x200, scoped, tag = 'scoped memory for tpu_custom_call.1']
  %s0 = inlined_call_operand.<no memory space> [shape: f32[1,1], index: 0, kind: input, shape index: {}]
  %s1 = inlined_call_operand.vmem [shape: f32[16,64], index: 1, kind: input, shape index: {}]
  %s2 = inlined_call_operand.vmem [shape: f32[64,16], index: 2, kind: input, shape index: {}]
  %s3 = inlined_call_operand.vmem [shape: f32[64,64], index: 3, kind: input, shape index: {}]
  %s4 = inlined_call_operand.hbm [shape: f32[64,64], index: 4, kind: input, shape index: {}]
  %s5 = inlined_call_operand.hbm [shape: f32[64,64], index: 5, kind: input, shape index: {}]
  %s6 = inlined_call_operand.hbm [shape: f32[64,128], index: 6, kind: input, shape index: {}]
  %s7 = inlined_call_operand.vmem [shape: f32[32,32], index: 7, kind: input, shape index: {}]
  %s8 = inlined_call_operand.vmem [shape: f32[32,1], index: 8, kind: input, shape index: {}]
  %s9 = inlined_call_operand.vmem [shape: f32[2,32,16], index: 9, kind: output, shape index: {}]
  %s10 = sld [smem:[#allocation0]]
  $region65: #{tpu_custom_call.1} parent=0
    _
  %s12 = ssub.s32 1, %s10
  %s13 = scalar_select 0, %s12, %s10
  %14 = sst [smem:[#allocation2]] %s0
  $region1: #{tpu_custom_call.1} parent=0
    #allocation3 [shape = 'u8[32768]{0}', space=vmem, size = 0x8000, scoped, tag = 'input window, operand 4, single buffered']
    #allocation4 [shape = 's32[1]{0}', space=sflag, size = 0x4, scoped, tag = 'scoped memory for tpu_custom_call.1']
    #allocation5 [shape = 'u8[32768]{0}', space=vmem, size = 0x8000, scoped, tag = 'input window, operand 5, single buffered']
    #allocation6 [shape = 's32[1]{0}', space=sflag, size = 0x4, scoped, tag = 'scoped memory for tpu_custom_call.1']
    #allocation7 [shape = 'u8[32768]{0}', space=vmem, size = 0x8000, scoped, tag = 'input window, operand 6, single buffered']
    %15 = vsyncpa [#allocation4], 0
    %16 = vsyncpa [#allocation6], 0
    // Predicated region
    $region2: #{tpu_custom_call.1} parent=1 // pred_check
      _
    $region3: #{tpu_custom_call.1} parent=1 // pred_check_branch
      %18 = sbr.rel (0) target = $region5
    $region4: #{tpu_custom_call.1} parent=1 // pred_region
      _
    $region5: #{tpu_custom_call.1} parent=1 // pred_fallthru
      _
    // Predicated region
    $region6: #{tpu_custom_call.1} parent=1 // pred_check
      _
    $region7: #{tpu_custom_call.1} parent=1 // pred_check_branch
      %20 = sbr.rel (0) target = $region9
    $region8: #{tpu_custom_call.1} parent=1 // pred_region
      _
    $region9: #{tpu_custom_call.1} parent=1 // pred_fallthru
      _
    // Predicated region
    $region10: #{tpu_custom_call.1} parent=1 // pred_check
      _
    $region11: #{tpu_custom_call.1} parent=1 // pred_check_branch
      %22 = sbr.rel (0) target = $region13
    $region12: #{tpu_custom_call.1} parent=1 // pred_region
      _
    $region13: #{tpu_custom_call.1} parent=1 // pred_fallthru
      _
    // Predicated region
    $region14: #{tpu_custom_call.1} parent=1 // pred_check
      _
    $region15: #{tpu_custom_call.1} parent=1 // pred_check_branch
      %24 = sbr.rel (0) target = $region17
    $region16: #{tpu_custom_call.1} parent=1 // pred_region
      _
    $region17: #{tpu_custom_call.1} parent=1 // pred_fallthru
      _
    // Predicated region
    $region18: #{tpu_custom_call.1} parent=1 // pred_check
      _
    $region19: #{tpu_custom_call.1} parent=1 // pred_check_branch
      %26 = sbr.rel (0) target = $region21
    $region20: #{tpu_custom_call.1} parent=1 // pred_region
      %28 = vsyncadd [#allocation4], 0
      %s29 = sshll.u32 %s4, 4
      %s30 = int_to_ptr.hbm [resolvable:$true] %s29
      %s31 = sshll.u32 [#allocation3], 4
      %s32 = int_to_ptr.vmem [resolvable:$true] %s31
      %37 = dma.hbm_to_vmem [thread:$0]  %s30, 1024, %s32, [#allocation4], 128, 128, 8
    $region21: #{tpu_custom_call.1} parent=1 // pred_fallthru
      _
    // Predicated region
    $region22: #{tpu_custom_call.1} parent=1 // pred_check
      _
    $region23: #{tpu_custom_call.1} parent=1 // pred_check_branch
      %39 = sbr.rel (0) target = $region25
    $region24: #{tpu_custom_call.1} parent=1 // pred_region
      %41 = vsyncadd [#allocation6], 0
      %s42 = sshll.u32 %s5, 4
      %s43 = int_to_ptr.hbm [resolvable:$true] %s42
      %s44 = sshll.u32 [#allocation5], 4
      %s45 = int_to_ptr.vmem [resolvable:$true] %s44
      %50 = dma.hbm_to_vmem [thread:$0]  %s43, 1024, %s45, [#allocation6], 128, 128, 8
    $region25: #{tpu_custom_call.1} parent=1 // pred_fallthru
      _
    // Predicated region
    $region26: #{tpu_custom_call.1} parent=1 // pred_check
      _
    $region27: #{tpu_custom_call.1} parent=1 // pred_check_branch
      %52 = sbr.rel (0) target = $region29
    $region28: #{tpu_custom_call.1} parent=1 // pred_region
      %54 = vsyncadd [#allocation6], 0
      %s55 = sshll.u32 %s6, 4
      %s56 = int_to_ptr.hbm [resolvable:$true] %s55
      %s57 = sshll.u32 [#allocation7], 4
      %s58 = int_to_ptr.vmem [resolvable:$true] %s57
      %63 = dma.hbm_to_vmem [thread:$0]  %s56, 1024, %s58, [#allocation6], 128, 128, 8
    $region29: #{tpu_custom_call.1} parent=1 // pred_fallthru
      _
    // Predicated region
    $region30: #{tpu_custom_call.1} parent=1 // pred_check
      _
    $region31: #{tpu_custom_call.1} parent=1 // pred_check_branch
      %65 = sbr.rel (0) target = $region33
    $region32: #{tpu_custom_call.1} parent=1 // pred_region
      _
    $region33: #{tpu_custom_call.1} parent=1 // pred_fallthru
      _
    // Predicated region
    $region34: #{tpu_custom_call.1} parent=1 // pred_check
      _
    $region35: #{tpu_custom_call.1} parent=1 // pred_check_branch
      %67 = sbr.rel (0) target = $region37
    $region36: #{tpu_custom_call.1} parent=1 // pred_region
      _
    $region37: #{tpu_custom_call.1} parent=1 // pred_fallthru
      _
    // Predicated region
    $region38: #{tpu_custom_call.1} parent=1 // pred_check
      _
    $region39: #{tpu_custom_call.1} parent=1 // pred_check_branch
      %69 = sbr.rel (0) target = $region41
    $region40: #{tpu_custom_call.1} parent=1 // pred_region
      %71 = dma.done [#allocation4], 1024
    $region41: #{tpu_custom_call.1} parent=1 // pred_fallthru
      _
    // Predicated region
    $region42: #{tpu_custom_call.1} parent=1 // pred_check
      _
    $region43: #{tpu_custom_call.1} parent=1 // pred_check_branch
      %73 = sbr.rel (0) target = $region45
    $region44: #{tpu_custom_call.1} parent=1 // pred_region
      %75 = dma.done [#allocation6], 1024
    $region45: #{tpu_custom_call.1} parent=1 // pred_fallthru
      _
    // Predicated region
    $region46: #{tpu_custom_call.1} parent=1 // pred_check
      _
    $region47: #{tpu_custom_call.1} parent=1 // pred_check_branch
      %77 = sbr.rel (0) target = $region49
    $region48: #{tpu_custom_call.1} parent=1 // pred_region
      %79 = dma.done [#allocation6], 1024
    $region49: #{tpu_custom_call.1} parent=1 // pred_fallthru
      _
    %s80 = sld [smem:[#allocation2]]
    %v81 = vld [vmem:[%s1] sm:$0xff]
    %v82 = vld [vmem:[%s1 + $0x8] sm:$0xff]
    %v83 = vld [vmem:[%s2] sm:$0xff]
    %v84 = vld [vmem:[%s2 + $0x8] sm:$0xff]
    %v85 = vld [vmem:[%s2 + $0x10] sm:$0xff]
    %v86 = vld [vmem:[%s2 + $0x18] sm:$0xff]
    %v87 = vld [vmem:[%s2 + $0x20] sm:$0xff]
    %v88 = vld [vmem:[%s2 + $0x28] sm:$0xff]
    %v89 = vld [vmem:[%s2 + $0x30] sm:$0xff]
    %v90 = vld [vmem:[%s2 + $0x38] sm:$0xff]
    %v91 = vld [vmem:[%s3] sm:$0xff]
    %v92 = vld [vmem:[%s3 + $0x8] sm:$0xff]
    %v93 = vld [vmem:[%s3 + $0x10] sm:$0xff]
    %v94 = vld [vmem:[%s3 + $0x18] sm:$0xff]
    %v95 = vld [vmem:[%s3 + $0x20] sm:$0xff]
    %v96 = vld [vmem:[%s3 + $0x28] sm:$0xff]
    %v97 = vld [vmem:[%s3 + $0x30] sm:$0xff]
    %v98 = vld [vmem:[%s3 + $0x38] sm:$0xff]
    %vm99 = vcmask 523264
    %v101 = vsel %vm99, %v81, 0
    %v104 = vsel %vm99, %v82, 0
    %106 = vmatpush.msra.mxu0 0.0
    %107 = vmatpush.msra.mxu0 0.0
    %108 = vmatpush.msra.mxu0 0.0
    %109 = vmatpush.msra.mxu0 0.0
    %110 = vmatpush.msra.mxu0 0.0
    %111 = vmatpush.msra.mxu0 0.0
    %112 = vmatpush.msra.mxu0 0.0
    %113 = vmatpush.msra.mxu0 0.0
    %114 = vmatpush.msra.mxu0 %v98
    %115 = vmatpush.msra.mxu0 %v97
    %116 = vmatpush.msra.mxu0 %v96
    %117 = vmatpush.msra.mxu0 %v95
    %118 = vmatpush.msra.mxu0 %v94
    %119 = vmatpush.msra.mxu0 %v93
    %120 = vmatpush.msra.mxu0 %v92
    %121 = vmatpush.msra.mxu0 %v91
    %122 = vmatmul.f32.gmra.mxu0 %v101
    %v123 = vpop.f32.mrf.mxu0
    %v124 = vadd.f32 0.0, %v123
    %125 = vmatmul.f32.gmra.mxu0 %v104
    %v126 = vpop.f32.mrf.mxu0
    %v127 = vadd.f32 0.0, %v126
    %128 = vdwg.mxu0
    %v129 = vmul.f32 %v124, 0.4204482
    %v130 = vmul.f32 %v127, 0.4204482
    %v131 = vld [vmem:[#allocation3] sm:$0xff]
    %v132 = vld [vmem:[#allocation3 + $0x8] sm:$0xff]
    %v133 = vld [vmem:[#allocation3 + $0x10] sm:$0xff]
    %v134 = vld [vmem:[#allocation3 + $0x18] sm:$0xff]
    %v135 = vld [vmem:[#allocation3 + $0x20] sm:$0xff]
    %v136 = vld [vmem:[#allocation3 + $0x28] sm:$0xff]
    %v137 = vld [vmem:[#allocation3 + $0x30] sm:$0xff]
    %v138 = vld [vmem:[#allocation3 + $0x38] sm:$0xff]
    %v140 = vsel %vm99, %v131, 0
    %v143 = vsel %vm99, %v132, 0
    %v146 = vsel %vm99, %v133, 0
    %v149 = vsel %vm99, %v134, 0
    %v152 = vsel %vm99, %v135, 0
    %v155 = vsel %vm99, %v136, 0
    %v158 = vsel %vm99, %v137, 0
    %v161 = vsel %vm99, %v138, 0
    %163 = vmatpush.msra.mxu0 0.0
    %164 = vmatpush.msra.mxu0 0.0
    %165 = vmatpush.msra.mxu0 0.0
    %166 = vmatpush.msra.mxu0 0.0
    %167 = vmatpush.msra.mxu0 0.0
    %168 = vmatpush.msra.mxu0 0.0
    %169 = vmatpush.msra.mxu0 0.0
    %170 = vmatpush.msra.mxu0 0.0
    %171 = vmatpush.msra.mxu0 %v90
    %172 = vmatpush.msra.mxu0 %v89
    %173 = vmatpush.msra.mxu0 %v88
    %174 = vmatpush.msra.mxu0 %v87
    %175 = vmatpush.msra.mxu0 %v86
    %176 = vmatpush.msra.mxu0 %v85
    %177 = vmatpush.msra.mxu0 %v84
    %178 = vmatpush.msra.mxu0 %v83
    %179 = vmatmul.f32.gmra.mxu0 %v140
    %v180 = vpop.f32.mrf.mxu0
    %v181 = vadd.f32 0.0, %v180
    %182 = vmatmul.f32.gmra.mxu0 %v143
    %v183 = vpop.f32.mrf.mxu0
    %v184 = vadd.f32 0.0, %v183
    %185 = vmatmul.f32.gmra.mxu0 %v146
    %v186 = vpop.f32.mrf.mxu0
    %v187 = vadd.f32 0.0, %v186
    %188 = vmatmul.f32.gmra.mxu0 %v149
    %v189 = vpop.f32.mrf.mxu0
    %v190 = vadd.f32 0.0, %v189
    %191 = vmatmul.f32.gmra.mxu0 %v152
    %v192 = vpop.f32.mrf.mxu0
    %v193 = vadd.f32 0.0, %v192
    %194 = vmatmul.f32.gmra.mxu0 %v155
    %v195 = vpop.f32.mrf.mxu0
    %v196 = vadd.f32 0.0, %v195
    %197 = vmatmul.f32.gmra.mxu0 %v158
    %v198 = vpop.f32.mrf.mxu0
    %v199 = vadd.f32 0.0, %v198
    %200 = vmatmul.f32.gmra.mxu0 %v161
    %v201 = vpop.f32.mrf.mxu0
    %v202 = vadd.f32 0.0, %v201
    %203 = vdwg.mxu0
    %v204 = vmul.f32 %v181, 0.4204482
    %v205 = vmul.f32 %v184, 0.4204482
    %v206 = vmul.f32 %v187, 0.4204482
    %v207 = vmul.f32 %v190, 0.4204482
    %v208 = vmul.f32 %v193, 0.4204482
    %v209 = vmul.f32 %v196, 0.4204482
    %v210 = vmul.f32 %v199, 0.4204482
    %v211 = vmul.f32 %v202, 0.4204482
    %v212 = vld [vmem:[#allocation5] sm:$0xff]
    %v213 = vld [vmem:[#allocation5 + $0x8] sm:$0xff]
    %v214 = vld [vmem:[#allocation5 + $0x10] sm:$0xff]
    %v215 = vld [vmem:[#allocation5 + $0x18] sm:$0xff]
    %v216 = vld [vmem:[#allocation5 + $0x20] sm:$0xff]
    %v217 = vld [vmem:[#allocation5 + $0x28] sm:$0xff]
    %v218 = vld [vmem:[#allocation5 + $0x30] sm:$0xff]
    %v219 = vld [vmem:[#allocation5 + $0x38] sm:$0xff]
    %v221 = vsel %vm99, %v212, 0
    %v224 = vsel %vm99, %v213, 0
    %v227 = vsel %vm99, %v214, 0
    %v230 = vsel %vm99, %v215, 0
    %v233 = vsel %vm99, %v216, 0
    %v236 = vsel %vm99, %v217, 0
    %v239 = vsel %vm99, %v218, 0
    %v242 = vsel %vm99, %v219, 0
    %244 = vmatpush.msra.mxu0 0.0
    %245 = vmatpush.msra.mxu0 0.0
    %246 = vmatpush.msra.mxu0 0.0
    %247 = vmatpush.msra.mxu0 0.0
    %248 = vmatpush.msra.mxu0 0.0
    %249 = vmatpush.msra.mxu0 0.0
    %250 = vmatpush.msra.mxu0 0.0
    %251 = vmatpush.msra.mxu0 0.0
    %252 = vmatpush.msra.mxu0 %v90
    %253 = vmatpush.msra.mxu0 %v89
    %254 = vmatpush.msra.mxu0 %v88
    %255 = vmatpush.msra.mxu0 %v87
    %256 = vmatpush.msra.mxu0 %v86
    %257 = vmatpush.msra.mxu0 %v85
    %258 = vmatpush.msra.mxu0 %v84
    %259 = vmatpush.msra.mxu0 %v83
    %260 = vmatmul.f32.gmra.mxu0 %v221
    %v261 = vpop.f32.mrf.mxu0
    %v262 = vadd.f32 0.0, %v261
    %263 = vmatmul.f32.gmra.mxu0 %v224
    %v264 = vpop.f32.mrf.mxu0
    %v265 = vadd.f32 0.0, %v264
    %266 = vmatmul.f32.gmra.mxu0 %v227
    %v267 = vpop.f32.mrf.mxu0
    %v268 = vadd.f32 0.0, %v267
    %269 = vmatmul.f32.gmra.mxu0 %v230
    %v270 = vpop.f32.mrf.mxu0
    %v271 = vadd.f32 0.0, %v270
    %272 = vmatmul.f32.gmra.mxu0 %v233
    %v273 = vpop.f32.mrf.mxu0
    %v274 = vadd.f32 0.0, %v273
    %275 = vmatmul.f32.gmra.mxu0 %v236
    %v276 = vpop.f32.mrf.mxu0
    %v277 = vadd.f32 0.0, %v276
    %278 = vmatmul.f32.gmra.mxu0 %v239
    %v279 = vpop.f32.mrf.mxu0
    %v280 = vadd.f32 0.0, %v279
    %281 = vmatmul.f32.gmra.mxu0 %v242
    %v282 = vpop.f32.mrf.mxu0
    %v283 = vadd.f32 0.0, %v282
    %284 = vdwg.mxu0
    %293 = vrot.lane.b32.xlu0 %v204, 16
    %v294 = vpop.permute.xlu0 %293
    %295 = vrot.lane.b32.xlu0 %v205, 16
    %v296 = vpop.permute.xlu0 %295
    %297 = vrot.lane.b32.xlu0 %v206, 16
    %v298 = vpop.permute.xlu0 %297
    %299 = vrot.lane.b32.xlu0 %v207, 16
    %v300 = vpop.permute.xlu0 %299
    %301 = vrot.lane.b32.xlu0 %v208, 16
    %v302 = vpop.permute.xlu0 %301
    %303 = vrot.lane.b32.xlu0 %v209, 16
    %v304 = vpop.permute.xlu0 %303
    %305 = vrot.lane.b32.xlu0 %v210, 16
    %v306 = vpop.permute.xlu0 %305
    %307 = vrot.lane.b32.xlu0 %v211, 16
    %v308 = vpop.permute.xlu0 %307
    %317 = vrot.lane.b32.xlu0 %v204, 32
    %v318 = vpop.permute.xlu0 %317
    %319 = vrot.lane.b32.xlu0 %v205, 32
    %v320 = vpop.permute.xlu0 %319
    %321 = vrot.lane.b32.xlu0 %v206, 32
    %v322 = vpop.permute.xlu0 %321
    %323 = vrot.lane.b32.xlu0 %v207, 32
    %v324 = vpop.permute.xlu0 %323
    %325 = vrot.lane.b32.xlu0 %v208, 32
    %v326 = vpop.permute.xlu0 %325
    %327 = vrot.lane.b32.xlu0 %v209, 32
    %v328 = vpop.permute.xlu0 %327
    %329 = vrot.lane.b32.xlu0 %v210, 32
    %v330 = vpop.permute.xlu0 %329
    %331 = vrot.lane.b32.xlu0 %v211, 32
    %v332 = vpop.permute.xlu0 %331
    %341 = vrot.lane.b32.xlu0 %v204, 48
    %v342 = vpop.permute.xlu0 %341
    %343 = vrot.lane.b32.xlu0 %v205, 48
    %v344 = vpop.permute.xlu0 %343
    %345 = vrot.lane.b32.xlu0 %v206, 48
    %v346 = vpop.permute.xlu0 %345
    %347 = vrot.lane.b32.xlu0 %v207, 48
    %v348 = vpop.permute.xlu0 %347
    %349 = vrot.lane.b32.xlu0 %v208, 48
    %v350 = vpop.permute.xlu0 %349
    %351 = vrot.lane.b32.xlu0 %v209, 48
    %v352 = vpop.permute.xlu0 %351
    %353 = vrot.lane.b32.xlu0 %v210, 48
    %v354 = vpop.permute.xlu0 %353
    %355 = vrot.lane.b32.xlu0 %v211, 48
    %v356 = vpop.permute.xlu0 %355
    %365 = vrot.lane.b32.xlu0 %v204, 64
    %v366 = vpop.permute.xlu0 %365
    %367 = vrot.lane.b32.xlu0 %v205, 64
    %v368 = vpop.permute.xlu0 %367
    %369 = vrot.lane.b32.xlu0 %v206, 64
    %v370 = vpop.permute.xlu0 %369
    %371 = vrot.lane.b32.xlu0 %v207, 64
    %v372 = vpop.permute.xlu0 %371
    %373 = vrot.lane.b32.xlu0 %v208, 64
    %v374 = vpop.permute.xlu0 %373
    %375 = vrot.lane.b32.xlu0 %v209, 64
    %v376 = vpop.permute.xlu0 %375
    %377 = vrot.lane.b32.xlu0 %v210, 64
    %v378 = vpop.permute.xlu0 %377
    %379 = vrot.lane.b32.xlu0 %v211, 64
    %v380 = vpop.permute.xlu0 %379
    %389 = vrot.lane.b32.xlu0 %v204, 80
    %v390 = vpop.permute.xlu0 %389
    %391 = vrot.lane.b32.xlu0 %v205, 80
    %v392 = vpop.permute.xlu0 %391
    %393 = vrot.lane.b32.xlu0 %v206, 80
    %v394 = vpop.permute.xlu0 %393
    %395 = vrot.lane.b32.xlu0 %v207, 80
    %v396 = vpop.permute.xlu0 %395
    %397 = vrot.lane.b32.xlu0 %v208, 80
    %v398 = vpop.permute.xlu0 %397
    %399 = vrot.lane.b32.xlu0 %v209, 80
    %v400 = vpop.permute.xlu0 %399
    %401 = vrot.lane.b32.xlu0 %v210, 80
    %v402 = vpop.permute.xlu0 %401
    %403 = vrot.lane.b32.xlu0 %v211, 80
    %v404 = vpop.permute.xlu0 %403
    %413 = vrot.lane.b32.xlu0 %v204, 96
    %v414 = vpop.permute.xlu0 %413
    %415 = vrot.lane.b32.xlu0 %v205, 96
    %v416 = vpop.permute.xlu0 %415
    %417 = vrot.lane.b32.xlu0 %v206, 96
    %v418 = vpop.permute.xlu0 %417
    %419 = vrot.lane.b32.xlu0 %v207, 96
    %v420 = vpop.permute.xlu0 %419
    %421 = vrot.lane.b32.xlu0 %v208, 96
    %v422 = vpop.permute.xlu0 %421
    %423 = vrot.lane.b32.xlu0 %v209, 96
    %v424 = vpop.permute.xlu0 %423
    %425 = vrot.lane.b32.xlu0 %v210, 96
    %v426 = vpop.permute.xlu0 %425
    %427 = vrot.lane.b32.xlu0 %v211, 96
    %v428 = vpop.permute.xlu0 %427
    %437 = vrot.lane.b32.xlu0 %v204, 112
    %v438 = vpop.permute.xlu0 %437
    %439 = vrot.lane.b32.xlu0 %v205, 112
    %v440 = vpop.permute.xlu0 %439
    %441 = vrot.lane.b32.xlu0 %v206, 112
    %v442 = vpop.permute.xlu0 %441
    %443 = vrot.lane.b32.xlu0 %v207, 112
    %v444 = vpop.permute.xlu0 %443
    %445 = vrot.lane.b32.xlu0 %v208, 112
    %v446 = vpop.permute.xlu0 %445
    %447 = vrot.lane.b32.xlu0 %v209, 112
    %v448 = vpop.permute.xlu0 %447
    %449 = vrot.lane.b32.xlu0 %v210, 112
    %v450 = vpop.permute.xlu0 %449
    %451 = vrot.lane.b32.xlu0 %v211, 112
    %v452 = vpop.permute.xlu0 %451
    %vm461 = vcmask 130048
    %v462 = vsel %vm461, %v204, %v294
    %v463 = vsel %vm461, %v205, %v296
    %v464 = vsel %vm461, %v206, %v298
    %v465 = vsel %vm461, %v207, %v300
    %v466 = vsel %vm461, %v208, %v302
    %v467 = vsel %vm461, %v209, %v304
    %v468 = vsel %vm461, %v210, %v306
    %v469 = vsel %vm461, %v211, %v308
    %vm470 = vcmask 261120
    %v471 = vsel %vm470, %v462, %v318
    %v472 = vsel %vm470, %v463, %v320
    %v473 = vsel %vm470, %v464, %v322
    %v474 = vsel %vm470, %v465, %v324
    %v475 = vsel %vm470, %v466, %v326
    %v476 = vsel %vm470, %v467, %v328
    %v477 = vsel %vm470, %v468, %v330
    %v478 = vsel %vm470, %v469, %v332
    %vm479 = vcmask 392192
    %v480 = vsel %vm479, %v471, %v342
    %v481 = vsel %vm479, %v472, %v344
    %v482 = vsel %vm479, %v473, %v346
    %v483 = vsel %vm479, %v474, %v348
    %v484 = vsel %vm479, %v475, %v350
    %v485 = vsel %vm479, %v476, %v352
    %v486 = vsel %vm479, %v477, %v354
    %v487 = vsel %vm479, %v478, %v356
    %v488 = vsel %vm99, %v480, %v366
    %v489 = vsel %vm99, %v481, %v368
    %v490 = vsel %vm99, %v482, %v370
    %v491 = vsel %vm99, %v483, %v372
    %v492 = vsel %vm99, %v484, %v374
    %v493 = vsel %vm99, %v485, %v376
    %v494 = vsel %vm99, %v486, %v378
    %v495 = vsel %vm99, %v487, %v380
    %vm496 = vcmask 654336
    %v497 = vsel %vm496, %v488, %v390
    %v498 = vsel %vm496, %v489, %v392
    %v499 = vsel %vm496, %v490, %v394
    %v500 = vsel %vm496, %v491, %v396
    %v501 = vsel %vm496, %v492, %v398
    %v502 = vsel %vm496, %v493, %v400
    %v503 = vsel %vm496, %v494, %v402
    %v504 = vsel %vm496, %v495, %v404
    %vm505 = vcmask 785408
    %v506 = vsel %vm505, %v497, %v414
    %v507 = vsel %vm505, %v498, %v416
    %v508 = vsel %vm505, %v499, %v418
    %v509 = vsel %vm505, %v500, %v420
    %v510 = vsel %vm505, %v501, %v422
    %v511 = vsel %vm505, %v502, %v424
    %v512 = vsel %vm505, %v503, %v426
    %v513 = vsel %vm505, %v504, %v428
    %vm514 = vcmask 916480
    %v515 = vsel %vm514, %v506, %v438
    %v516 = vsel %vm514, %v507, %v440
    %v517 = vsel %vm514, %v508, %v442
    %v518 = vsel %vm514, %v509, %v444
    %v519 = vsel %vm514, %v510, %v446
    %v520 = vsel %vm514, %v511, %v448
    %v521 = vsel %vm514, %v512, %v450
    %v522 = vsel %vm514, %v513, %v452
    %v523 = vld [vmem:[#allocation7] sm:$0xff]
    %v524 = vld [vmem:[#allocation7 + $0x8] sm:$0xff]
    %v525 = vld [vmem:[#allocation7 + $0x10] sm:$0xff]
    %v526 = vld [vmem:[#allocation7 + $0x18] sm:$0xff]
    %v527 = vld [vmem:[#allocation7 + $0x20] sm:$0xff]
    %v528 = vld [vmem:[#allocation7 + $0x28] sm:$0xff]
    %v529 = vld [vmem:[#allocation7 + $0x30] sm:$0xff]
    %v530 = vld [vmem:[#allocation7 + $0x38] sm:$0xff]
    %v531 = vmul.f32 %v515, %v523
    %v532 = vmul.f32 %v516, %v524
    %v533 = vmul.f32 %v517, %v525
    %v534 = vmul.f32 %v518, %v526
    %v535 = vmul.f32 %v519, %v527
    %v536 = vmul.f32 %v520, %v528
    %v537 = vmul.f32 %v521, %v529
    %v538 = vmul.f32 %v522, %v530
    %v540 = vsel %vm99, %v129, 0
    %v543 = vsel %vm99, %v130, 0
    %545 = vmatpush.msra.mxu0 0.0
    %546 = vmatpush.msra.mxu0 0.0
    %547 = vmatpush.msra.mxu0 0.0
    %548 = vmatpush.msra.mxu0 0.0
    %549 = vmatpush.msra.mxu0 0.0
    %550 = vmatpush.msra.mxu0 0.0
    %551 = vmatpush.msra.mxu0 0.0
    %552 = vmatpush.msra.mxu0 0.0
    %553 = vmatpush.msra.mxu0 %v538
    %554 = vmatpush.msra.mxu0 %v537
    %555 = vmatpush.msra.mxu0 %v536
    %556 = vmatpush.msra.mxu0 %v535
    %557 = vmatpush.msra.mxu0 %v534
    %558 = vmatpush.msra.mxu0 %v533
    %559 = vmatpush.msra.mxu0 %v532
    %560 = vmatpush.msra.mxu0 %v531
    %561 = vmatmul.f32.gmra.mxu0 %v540
    %v562 = vpop.f32.mrf.mxu0
    %v563 = vadd.f32 0.0, %v562
    %564 = vmatmul.f32.gmra.mxu0 %v543
    %v565 = vpop.f32.mrf.mxu0
    %v566 = vadd.f32 0.0, %v565
    %567 = vdwg.mxu0
    %s568 = ssub.f32 %s80, 1.0
    %v569 = vstv %s568
    %v570 = vrcp.pop %v569
    %v571 = vmul.f32 %v569, %v570
    %v572 = vsub.f32 1.0, %v571
    %v573 = vmul.f32 %v570, %v572
    %v574 = vadd.f32 %v570, %v573
    %vm575 = vweird.f32 %v569
    %vm576 = vweird.f32 %v570
    %vm577 = vmor %vm575, %vm576
    %v578 = vsel %vm577, %v570, %v574
    %v579 = vand.u32 2147483647, %v569
    %vm580 = vcmp.eq.f32.partialorder %v579, 8.507059e+37
    %v581 = vand.u32 %v569, 2147483648
    %v582 = vor.u32 1.1754944e-38, %v581
    %v583 = vsel %vm580, %v582, %v578
    %s584 = vtos %v583
    %v585 = vstv %s568
    %v586 = vmul.f32 %v563, %v585
    %v587 = vmul.f32 %v566, %v585
    %v588 = vmax.f32 %v586, %v587
    %v589 = vrot.slane %v588, 4
    %v590 = vmax.f32 %v588, %v589
    %v591 = vrot.slane %v590, 2
    %v592 = vmax.f32 %v590, %v591
    %v593 = vrot.slane %v592, 1
    %v594 = vmax.f32 %v592, %v593
    %s595 = smul.f32 %s568, -2.7725887
    %v596 = vstv %s595
    %v597 = vmul.f32 %v596, 1.442695
    %v598 = vpow.pop %v597
    %s599 = vtos %v598
    %v600 = vsub.f32 %v594, 1.0
    %v601 = vstv %s599
    %v602 = vsub.f32 %v594, %v601
    %v603 = vsub.f32 %v586, %v600
    %v604 = vsub.f32 %v587, %v600
    %v605 = vmax.f32 %v603, 0.0
    %v606 = vmax.f32 %v604, 0.0
    %vm607 = vcmp.gt.f32.partialorder %v605, 0.0
    %vm608 = vcmp.gt.f32.partialorder %v606, 0.0
    %v609 = vsel %vm607, %v605, 1.0
    %v610 = vsel %vm608, %v606, 1.0
    %v611 = vlog2.pop %v609
    %v612 = vmul.f32 %v611, 0.6931472
    %v613 = vlog2.pop %v610
    %v614 = vmul.f32 %v613, 0.6931472
    %v615 = vstv %s584
    %v616 = vmul.f32 %v615, %v612
    %v617 = vmul.f32 %v615, %v614
    %v618 = vmul.f32 %v616, 1.442695
    %v619 = vpow.pop %v618
    %v620 = vmul.f32 %v617, 1.442695
    %v621 = vpow.pop %v620
    %v622 = vsel %vm607, %v619, 0.0
    %v623 = vsel %vm608, %v621, 0.0
    %v624 = vadd.f32 %v622, %v623
    %v625 = vrot.slane %v624, 4
    %v626 = vadd.f32 %v624, %v625
    %v627 = vrot.slane %v626, 2
    %v628 = vadd.f32 %v626, %v627
    %v629 = vrot.slane %v628, 1
    %v630 = vadd.f32 %v628, %v629
    %v631 = vsub.f32 %v630, 1.0
    %v632 = vsub.f32 %v602, %v600
    loop: start=0, step=1, limit=30
    $region50: #{tpu_custom_call.1} parent=1 // loop_pre_header
      _
    $region51: #{tpu_custom_call.1} parent=1 // loop_header
      %s634 = sphi 0, %s638
      %p635 = scmp.ge.s32.totalorder %s634, 30
      %v639 = vphi %v632, %v643
      %v640 = vphi %v600, %v675
      %v641 = vphi 0.0, %v663
      %v642 = vphi 0.0, %v664
    $region52: #{tpu_custom_call.1} parent=1 // loop_header_branch
      %637 = sbr.rel (%p635) target = $region56
    $region53: #{tpu_custom_call.1} parent=1 // loop_body
      %v643 = vmul.f32 %v639, 0.5
      %v644 = vadd.f32 %v640, %v643
      %v645 = vsub.f32 %v586, %v644
      %v646 = vsub.f32 %v587, %v644
      %v647 = vmax.f32 %v645, 0.0
      %v648 = vmax.f32 %v646, 0.0
      %vm649 = vcmp.gt.f32.partialorder %v647, 0.0
      %vm650 = vcmp.gt.f32.partialorder %v648, 0.0
      %v651 = vsel %vm649, %v647, 1.0
      %v652 = vsel %vm650, %v648, 1.0
      %v653 = vlog2.pop %v651
      %v654 = vmul.f32 %v653, 0.6931472
      %v655 = vlog2.pop %v652
      %v656 = vmul.f32 %v655, 0.6931472
      %v657 = vmul.f32 %v615, %v654
      %v658 = vmul.f32 %v615, %v656
      %v659 = vmul.f32 %v657, 1.442695
      %v660 = vpow.pop %v659
      %v661 = vmul.f32 %v658, 1.442695
      %v662 = vpow.pop %v661
      %v663 = vsel %vm649, %v660, 0.0
      %v664 = vsel %vm650, %v662, 0.0
      %v665 = vadd.f32 %v663, %v664
      %v666 = vrot.slane %v665, 4
      %v667 = vadd.f32 %v665, %v666
      %v668 = vrot.slane %v667, 2
      %v669 = vadd.f32 %v667, %v668
      %v670 = vrot.slane %v669, 1
      %v671 = vadd.f32 %v669, %v670
      %v672 = vsub.f32 %v671, 1.0
      %v673 = vmul.f32 %v672, %v631
      %vm674 = vcmp.ge.f32.partialorder %v673, 0.0
      %v675 = vsel %vm674, %v644, %v640
    $region54: #{tpu_custom_call.1} parent=1 // loop_footer
      %s638 = sadd.s32 1, %s634
    $region55: #{tpu_custom_call.1} parent=1 // loop_footer_branch
      %633 = sbr.rel target = $region51
    $region56: #{tpu_custom_call.1} parent=1 // loop_exit
      _
    %v676 = vadd.f32 %v641, %v642
    %v677 = vrot.slane %v676, 4
    %v678 = vadd.f32 %v676, %v677
    %v679 = vrot.slane %v678, 2
    %v680 = vadd.f32 %v678, %v679
    %v681 = vrot.slane %v680, 1
    %v682 = vadd.f32 %v680, %v681
    %v683 = vrcp.pop %v682
    %v684 = vmul.f32 %v682, %v683
    %v685 = vsub.f32 1.0, %v684
    %v686 = vmul.f32 %v683, %v685
    %v687 = vadd.f32 %v683, %v686
    %vm688 = vweird.f32 %v682
    %vm689 = vweird.f32 %v683
    %vm690 = vmor %vm688, %vm689
    %v691 = vsel %vm690, %v683, %v687
    %v692 = vand.u32 2147483647, %v682
    %vm693 = vcmp.eq.f32.partialorder %v692, 8.507059e+37
    %v694 = vand.u32 %v682, 2147483648
    %v695 = vor.u32 1.1754944e-38, %v694
    %v696 = vsel %vm693, %v695, %v691
    %v697 = vmul.f32 %v641, %v696
    %v698 = vmul.f32 %v642, %v696
    %v699 = vld [vmem:[%s7] sm:$0xff]
    %v700 = vld [vmem:[%s7 + $0x8] sm:$0xff]
    %v701 = vld [vmem:[%s7 + $0x10] sm:$0xff]
    %v702 = vld [vmem:[%s7 + $0x18] sm:$0xff]
    %v703 = vld [vmem:[%s8] sm:$0xff]
    %v704 = vld [vmem:[%s8 + $0x8] sm:$0xff]
    %v705 = vld [vmem:[%s8 + $0x10] sm:$0xff]
    %v706 = vld [vmem:[%s8 + $0x18] sm:$0xff]
    %v708 = vsel %vm461, %v262, 0
    %710 = vmatpush.msra.mxu0 0.0
    %711 = vmatpush.msra.mxu0 0.0
    %712 = vmatpush.msra.mxu0 0.0
    %713 = vmatpush.msra.mxu0 0.0
    %714 = vmatpush.msra.mxu0 0.0
    %715 = vmatpush.msra.mxu0 0.0
    %716 = vmatpush.msra.mxu0 0.0
    %717 = vmatpush.msra.mxu0 0.0
    %718 = vmatpush.msra.mxu0 0.0
    %719 = vmatpush.msra.mxu0 0.0
    %720 = vmatpush.msra.mxu0 0.0
    %721 = vmatpush.msra.mxu0 0.0
    %722 = vmatpush.msra.mxu0 0.0
    %723 = vmatpush.msra.mxu0 0.0
    %724 = vmatpush.msra.mxu0 %v698
    %725 = vmatpush.msra.mxu0 %v697
    %726 = vmatmul.f32.gmra.mxu0 %v708
    %v727 = vpop.f32.mrf.mxu0
    %v728 = vadd.f32 0.0, %v727
    %729 = vdwg.mxu0
    %732 = vrot.lane.b32.xlu0 %v697, 112
    %v733 = vpop.permute.xlu0 %732
    %734 = vrot.lane.b32.xlu0 %v698, 112
    %v735 = vpop.permute.xlu0 %734
    %v739 = vsel %vm461, %v265, 0
    %741 = vmatpush.msra.mxu0 0.0
    %742 = vmatpush.msra.mxu0 0.0
    %743 = vmatpush.msra.mxu0 0.0
    %744 = vmatpush.msra.mxu0 0.0
    %745 = vmatpush.msra.mxu0 0.0
    %746 = vmatpush.msra.mxu0 0.0
    %747 = vmatpush.msra.mxu0 0.0
    %748 = vmatpush.msra.mxu0 0.0
    %749 = vmatpush.msra.mxu0 0.0
    %750 = vmatpush.msra.mxu0 0.0
    %751 = vmatpush.msra.mxu0 0.0
    %752 = vmatpush.msra.mxu0 0.0
    %753 = vmatpush.msra.mxu0 0.0
    %754 = vmatpush.msra.mxu0 0.0
    %755 = vmatpush.msra.mxu0 %v735
    %756 = vmatpush.msra.mxu0 %v733
    %757 = vmatmul.f32.gmra.mxu0 %v739
    %v758 = vpop.f32.mrf.mxu0
    %v759 = vadd.f32 0.0, %v758
    %760 = vdwg.mxu0
    %761 = vrot.lane.b32.xlu0 %v697, 96
    %v762 = vpop.permute.xlu0 %761
    %763 = vrot.lane.b32.xlu0 %v698, 96
    %v764 = vpop.permute.xlu0 %763
    %v768 = vsel %vm461, %v268, 0
    %770 = vmatpush.msra.mxu0 0.0
    %771 = vmatpush.msra.mxu0 0.0
    %772 = vmatpush.msra.mxu0 0.0
    %773 = vmatpush.msra.mxu0 0.0
    %774 = vmatpush.msra.mxu0 0.0
    %775 = vmatpush.msra.mxu0 0.0
    %776 = vmatpush.msra.mxu0 0.0
    %777 = vmatpush.msra.mxu0 0.0
    %778 = vmatpush.msra.mxu0 0.0
    %779 = vmatpush.msra.mxu0 0.0
    %780 = vmatpush.msra.mxu0 0.0
    %781 = vmatpush.msra.mxu0 0.0
    %782 = vmatpush.msra.mxu0 0.0
    %783 = vmatpush.msra.mxu0 0.0
    %784 = vmatpush.msra.mxu0 %v764
    %785 = vmatpush.msra.mxu0 %v762
    %786 = vmatmul.f32.gmra.mxu0 %v768
    %v787 = vpop.f32.mrf.mxu0
    %v788 = vadd.f32 0.0, %v787
    %789 = vdwg.mxu0
    %790 = vrot.lane.b32.xlu0 %v697, 80
    %v791 = vpop.permute.xlu0 %790
    %792 = vrot.lane.b32.xlu0 %v698, 80
    %v793 = vpop.permute.xlu0 %792
    %v797 = vsel %vm461, %v271, 0
    %799 = vmatpush.msra.mxu0 0.0
    %800 = vmatpush.msra.mxu0 0.0
    %801 = vmatpush.msra.mxu0 0.0
    %802 = vmatpush.msra.mxu0 0.0
    %803 = vmatpush.msra.mxu0 0.0
    %804 = vmatpush.msra.mxu0 0.0
    %805 = vmatpush.msra.mxu0 0.0
    %806 = vmatpush.msra.mxu0 0.0
    %807 = vmatpush.msra.mxu0 0.0
    %808 = vmatpush.msra.mxu0 0.0
    %809 = vmatpush.msra.mxu0 0.0
    %810 = vmatpush.msra.mxu0 0.0
    %811 = vmatpush.msra.mxu0 0.0
    %812 = vmatpush.msra.mxu0 0.0
    %813 = vmatpush.msra.mxu0 %v793
    %814 = vmatpush.msra.mxu0 %v791
    %815 = vmatmul.f32.gmra.mxu0 %v797
    %v816 = vpop.f32.mrf.mxu0
    %v817 = vadd.f32 0.0, %v816
    %818 = vdwg.mxu0
    %820 = vset.pattern.permute.xlu0 0
    %821 = vperm.xlu0 %820, %v703
    %v822 = vpop.permute.xlu0 %821
    %825 = vset.pattern.permute.xlu0 0
    %826 = vperm.xlu0 %825, %v704
    %v827 = vpop.permute.xlu0 %826
    %830 = vset.pattern.permute.xlu0 0
    %831 = vperm.xlu0 %830, %v705
    %v832 = vpop.permute.xlu0 %831
    %835 = vset.pattern.permute.xlu0 0
    %836 = vperm.xlu0 %835, %v706
    %v837 = vpop.permute.xlu0 %836
    %v840 = vsel %vm470, %v699, 0
    %v843 = vsel %vm470, %v700, 0
    %v846 = vsel %vm470, %v701, 0
    %v849 = vsel %vm470, %v702, 0
    %851 = vmatpush.msra.mxu0 0.0
    %852 = vmatpush.msra.mxu0 0.0
    %853 = vmatpush.msra.mxu0 0.0
    %854 = vmatpush.msra.mxu0 0.0
    %855 = vmatpush.msra.mxu0 0.0
    %856 = vmatpush.msra.mxu0 0.0
    %857 = vmatpush.msra.mxu0 0.0
    %858 = vmatpush.msra.mxu0 0.0
    %859 = vmatpush.msra.mxu0 0.0
    %860 = vmatpush.msra.mxu0 0.0
    %861 = vmatpush.msra.mxu0 0.0
    %862 = vmatpush.msra.mxu0 0.0
    %863 = vmatpush.msra.mxu0 %v817
    %864 = vmatpush.msra.mxu0 %v788
    %865 = vmatpush.msra.mxu0 %v759
    %866 = vmatpush.msra.mxu0 %v728
    %867 = vmatmul.f32.gmra.mxu0 %v840
    %v868 = vpop.f32.mrf.mxu0
    %v869 = vadd.f32 %v822, %v868
    %870 = vmatmul.f32.gmra.mxu0 %v843
    %v871 = vpop.f32.mrf.mxu0
    %v872 = vadd.f32 %v827, %v871
    %873 = vmatmul.f32.gmra.mxu0 %v846
    %v874 = vpop.f32.mrf.mxu0
    %v875 = vadd.f32 %v832, %v874
    %876 = vmatmul.f32.gmra.mxu0 %v849
    %v877 = vpop.f32.mrf.mxu0
    %v878 = vadd.f32 %v837, %v877
    %879 = vdwg.mxu0
    %880 = vst.msk [vmem:[%s9] sm:$0xff] %vm461, %v869
    %881 = vst.msk [vmem:[%s9 + $0x8] sm:$0xff] %vm461, %v872
    %882 = vst.msk [vmem:[%s9 + $0x10] sm:$0xff] %vm461, %v875
    %883 = vst.msk [vmem:[%s9 + $0x18] sm:$0xff] %vm461, %v878
    %884 = vrot.lane.b32.xlu0 %v697, 64
    %v885 = vpop.permute.xlu0 %884
    %886 = vrot.lane.b32.xlu0 %v698, 64
    %v887 = vpop.permute.xlu0 %886
    %v891 = vsel %vm461, %v274, 0
    %893 = vmatpush.msra.mxu0 0.0
    %894 = vmatpush.msra.mxu0 0.0
    %895 = vmatpush.msra.mxu0 0.0
    %896 = vmatpush.msra.mxu0 0.0
    %897 = vmatpush.msra.mxu0 0.0
    %898 = vmatpush.msra.mxu0 0.0
    %899 = vmatpush.msra.mxu0 0.0
    %900 = vmatpush.msra.mxu0 0.0
    %901 = vmatpush.msra.mxu0 0.0
    %902 = vmatpush.msra.mxu0 0.0
    %903 = vmatpush.msra.mxu0 0.0
    %904 = vmatpush.msra.mxu0 0.0
    %905 = vmatpush.msra.mxu0 0.0
    %906 = vmatpush.msra.mxu0 0.0
    %907 = vmatpush.msra.mxu0 %v887
    %908 = vmatpush.msra.mxu0 %v885
    %909 = vmatmul.f32.gmra.mxu0 %v891
    %v910 = vpop.f32.mrf.mxu0
    %v911 = vadd.f32 0.0, %v910
    %912 = vdwg.mxu0
    %913 = vrot.lane.b32.xlu0 %v697, 48
    %v914 = vpop.permute.xlu0 %913
    %915 = vrot.lane.b32.xlu0 %v698, 48
    %v916 = vpop.permute.xlu0 %915
    %v920 = vsel %vm461, %v277, 0
    %922 = vmatpush.msra.mxu0 0.0
    %923 = vmatpush.msra.mxu0 0.0
    %924 = vmatpush.msra.mxu0 0.0
    %925 = vmatpush.msra.mxu0 0.0
    %926 = vmatpush.msra.mxu0 0.0
    %927 = vmatpush.msra.mxu0 0.0
    %928 = vmatpush.msra.mxu0 0.0
    %929 = vmatpush.msra.mxu0 0.0
    %930 = vmatpush.msra.mxu0 0.0
    %931 = vmatpush.msra.mxu0 0.0
    %932 = vmatpush.msra.mxu0 0.0
    %933 = vmatpush.msra.mxu0 0.0
    %934 = vmatpush.msra.mxu0 0.0
    %935 = vmatpush.msra.mxu0 0.0
    %936 = vmatpush.msra.mxu0 %v916
    %937 = vmatpush.msra.mxu0 %v914
    %938 = vmatmul.f32.gmra.mxu0 %v920
    %v939 = vpop.f32.mrf.mxu0
    %v940 = vadd.f32 0.0, %v939
    %941 = vdwg.mxu0
    %942 = vrot.lane.b32.xlu0 %v697, 32
    %v943 = vpop.permute.xlu0 %942
    %944 = vrot.lane.b32.xlu0 %v698, 32
    %v945 = vpop.permute.xlu0 %944
    %v949 = vsel %vm461, %v280, 0
    %951 = vmatpush.msra.mxu0 0.0
    %952 = vmatpush.msra.mxu0 0.0
    %953 = vmatpush.msra.mxu0 0.0
    %954 = vmatpush.msra.mxu0 0.0
    %955 = vmatpush.msra.mxu0 0.0
    %956 = vmatpush.msra.mxu0 0.0
    %957 = vmatpush.msra.mxu0 0.0
    %958 = vmatpush.msra.mxu0 0.0
    %959 = vmatpush.msra.mxu0 0.0
    %960 = vmatpush.msra.mxu0 0.0
    %961 = vmatpush.msra.mxu0 0.0
    %962 = vmatpush.msra.mxu0 0.0
    %963 = vmatpush.msra.mxu0 0.0
    %964 = vmatpush.msra.mxu0 0.0
    %965 = vmatpush.msra.mxu0 %v945
    %966 = vmatpush.msra.mxu0 %v943
    %967 = vmatmul.f32.gmra.mxu0 %v949
    %v968 = vpop.f32.mrf.mxu0
    %v969 = vadd.f32 0.0, %v968
    %970 = vdwg.mxu0
    %971 = vrot.lane.b32.xlu0 %v697, 16
    %v972 = vpop.permute.xlu0 %971
    %973 = vrot.lane.b32.xlu0 %v698, 16
    %v974 = vpop.permute.xlu0 %973
    %v978 = vsel %vm461, %v283, 0
    %980 = vmatpush.msra.mxu0 0.0
    %981 = vmatpush.msra.mxu0 0.0
    %982 = vmatpush.msra.mxu0 0.0
    %983 = vmatpush.msra.mxu0 0.0
    %984 = vmatpush.msra.mxu0 0.0
    %985 = vmatpush.msra.mxu0 0.0
    %986 = vmatpush.msra.mxu0 0.0
    %987 = vmatpush.msra.mxu0 0.0
    %988 = vmatpush.msra.mxu0 0.0
    %989 = vmatpush.msra.mxu0 0.0
    %990 = vmatpush.msra.mxu0 0.0
    %991 = vmatpush.msra.mxu0 0.0
    %992 = vmatpush.msra.mxu0 0.0
    %993 = vmatpush.msra.mxu0 0.0
    %994 = vmatpush.msra.mxu0 %v974
    %995 = vmatpush.msra.mxu0 %v972
    %996 = vmatmul.f32.gmra.mxu0 %v978
    %v997 = vpop.f32.mrf.mxu0
    %v998 = vadd.f32 0.0, %v997
    %999 = vdwg.mxu0
    %1000 = vmatpush.msra.mxu0 0.0
    %1001 = vmatpush.msra.mxu0 0.0
    %1002 = vmatpush.msra.mxu0 0.0
    %1003 = vmatpush.msra.mxu0 0.0
    %1004 = vmatpush.msra.mxu0 0.0
    %1005 = vmatpush.msra.mxu0 0.0
    %1006 = vmatpush.msra.mxu0 0.0
    %1007 = vmatpush.msra.mxu0 0.0
    %1008 = vmatpush.msra.mxu0 0.0
    %1009 = vmatpush.msra.mxu0 0.0
    %1010 = vmatpush.msra.mxu0 0.0
    %1011 = vmatpush.msra.mxu0 0.0
    %1012 = vmatpush.msra.mxu0 %v998
    %1013 = vmatpush.msra.mxu0 %v969
    %1014 = vmatpush.msra.mxu0 %v940
    %1015 = vmatpush.msra.mxu0 %v911
    %1016 = vmatmul.f32.gmra.mxu0 %v840
    %v1017 = vpop.f32.mrf.mxu0
    %v1018 = vadd.f32 %v822, %v1017
    %1019 = vmatmul.f32.gmra.mxu0 %v843
    %v1020 = vpop.f32.mrf.mxu0
    %v1021 = vadd.f32 %v827, %v1020
    %1022 = vmatmul.f32.gmra.mxu0 %v846
    %v1023 = vpop.f32.mrf.mxu0
    %v1024 = vadd.f32 %v832, %v1023
    %1025 = vmatmul.f32.gmra.mxu0 %v849
    %v1026 = vpop.f32.mrf.mxu0
    %v1027 = vadd.f32 %v837, %v1026
    %1028 = vdwg.mxu0
    %s1029 = scalar_lea.vmem %s9, 32
    %1030 = vst.msk [vmem:[%s1029] sm:$0xff] %vm461, %v1018
    %1031 = vst.msk [vmem:[%s1029 + $0x8] sm:$0xff] %vm461, %v1021
    %1032 = vst.msk [vmem:[%s1029 + $0x10] sm:$0xff] %vm461, %v1024
    %1033 = vst.msk [vmem:[%s1029 + $0x18] sm:$0xff] %vm461, %v1027
    // Predicated region
    $region57: #{tpu_custom_call.1} parent=1 // pred_check
      _
    $region58: #{tpu_custom_call.1} parent=1 // pred_check_branch
      %1035 = sbr.rel (0) target = $region60
    $region59: #{tpu_custom_call.1} parent=1 // pred_region
      _
    $region60: #{tpu_custom_call.1} parent=1 // pred_fallthru
      _
    // Predicated region
    $region61: #{tpu_custom_call.1} parent=1 // pred_check
      _
    $region62: #{tpu_custom_call.1} parent=1 // pred_check_branch
      %1037 = sbr.rel (0) target = $region64
    $region63: #{tpu_custom_call.1} parent=1 // pred_region
      _
    $region64: #{tpu_custom_call.1} parent=1 // pred_fallthru
      _
    %1038 = vsyncpa [#allocation4], 1
    %1039 = vsyncpa [#allocation6], 1

</llo_original>
